<compile_context>
chip_gen: v7x
topology: tpu7x:2x2x1
jax: 0.10.0
libtpu: 0.0.40
codegen_flags: <defaults>
</compile_context>

<pallas_src>
import math

import jax
import jax.numpy as jnp
from jax.experimental import pallas as pl
from jax.experimental.pallas import tpu as pltpu


def _round_up(x, m):
    return ((x + m - 1) // m) * m


def _ffn_kernel(x_ref, w1_ref, b1_ref, w2_ref, b2_ref, o_ref, acc_ref):
    # x_ref:  (tm, d_model)   row tile (constant across the k axis)
    # w1_ref: (d_model, tf)   d_ffn slice of W1, b1_ref: (1, tf)
    # w2_ref: (tf, d_model)   d_ffn slice of W2, b2_ref: (1, d_model)
    # o_ref:  (tm, d_model)   resident output tile, acc_ref: f32 accumulator
    k = pl.program_id(1)

    # Initialize the accumulator with the broadcast second bias (saves a
    # separate read-modify-write of the accumulator at finalize time).
    @pl.when(k == 0)
    def _():
        acc_ref[...] = jnp.broadcast_to(
            b2_ref[...].astype(jnp.float32), acc_ref.shape)

    # First matmul on this d_ffn slice (bf16 inputs, f32 MXU accumulation).
    h = jnp.dot(x_ref[...], w1_ref[...], preferred_element_type=jnp.float32)
    h = jnp.maximum(h + b1_ref[...].astype(jnp.float32), 0.0)  # ReLU
    # Dropout: identity in inference mode.

    # Second matmul: accumulate partial (tm, d_model) products over d_ffn tiles.
    acc_ref[...] += jnp.dot(h.astype(w2_ref.dtype), w2_ref[...],
                            preferred_element_type=jnp.float32)

    @pl.when(k == pl.num_programs(1) - 1)
    def _():
        o_ref[...] = acc_ref[...].astype(o_ref.dtype)


def positionwise_feed_forward(x, w1, b1, w2, b2, *, tm=256, tf=512,
                              compute_dtype=jnp.bfloat16):
    """x: (batch, seq, d_model) -> (batch, seq, d_model).

    tm: row tile (128 is a good choice on v5e, 256-512 on v6e/v7x).
    tf: d_ffn tile streamed per reduction step.
    """
    B, S, d_model = x.shape
    d_ffn = w1.shape[1]
    out_dtype = x.dtype
    M = B * S

    # ---- choose tiles; shrink for small problems, keep (8,128)-friendly ----
    tm = max(16, min(tm, _round_up(M, 16)))
    tf = min(tf, d_ffn)
    M_pad = _round_up(M, tm)
    d_ffn_pad = _round_up(d_ffn, tf)

    # ---- cast to bf16 for MXU-native matmuls (accumulation stays f32) ----
    x2d = x.reshape(M, d_model).astype(compute_dtype)
    w1c = w1.astype(compute_dtype)
    b1c = b1.reshape(1, d_ffn).astype(compute_dtype)
    w2c = w2.astype(compute_dtype)
    b2c = b2.reshape(1, d_model).astype(compute_dtype)

    # ---- zero-pad rows / d_ffn so the grid tiles evenly ----
    if M_pad != M:
        x2d = jnp.pad(x2d, ((0, M_pad - M), (0, 0)))
    if d_ffn_pad != d_ffn:
        # Padded hidden units: ReLU(x@0 + 0) = 0 and zero W2 rows -> no effect.
        w1c = jnp.pad(w1c, ((0, 0), (0, d_ffn_pad - d_ffn)))
        b1c = jnp.pad(b1c, ((0, 0), (0, d_ffn_pad - d_ffn)))
        w2c = jnp.pad(w2c, ((0, d_ffn_pad - d_ffn), (0, 0)))

    grid = (M_pad // tm, d_ffn_pad // tf)

    # ---- explicit VMEM budget: double-buffered tiles + f32 accumulator ----
    isz = jnp.dtype(compute_dtype).itemsize
    vmem_need = 2 * isz * (tm * d_model          # x tile
                           + d_model * tf + tf   # W1 slice + b1 slice
                           + tf * d_model        # W2 slice
                           + d_model)            # b2
    vmem_need += 2 * jnp.dtype(out_dtype).itemsize * tm * d_model  # out tile
    vmem_need += 4 * tm * d_model                                  # f32 acc
    vmem_limit = min(max(int(1.5 * vmem_need) + (4 << 20), 16 << 20), 64 << 20)

    out2d = pl.pallas_call(
        _ffn_kernel,
        out_shape=jax.ShapeDtypeStruct((M_pad, d_model), out_dtype),
        grid_spec=pltpu.PrefetchScalarGridSpec(
            num_scalar_prefetch=0,
            grid=grid,
            in_specs=[
                pl.BlockSpec((tm, d_model), lambda i, k: (i, 0)),   # x rows
                pl.BlockSpec((d_model, tf), lambda i, k: (0, k)),   # W1 slice
                pl.BlockSpec((1, tf),       lambda i, k: (0, k)),   # b1 slice
                pl.BlockSpec((tf, d_model), lambda i, k: (k, 0)),   # W2 slice
                pl.BlockSpec((1, d_model),  lambda i, k: (0, 0)),   # b2
            ],
            out_specs=pl.BlockSpec((tm, d_model), lambda i, k: (i, 0)),
            scratch_shapes=[pltpu.VMEM((tm, d_model), jnp.float32)],
        ),
        compiler_params=pltpu.CompilerParams(
            dimension_semantics=("parallel", "arbitrary"),
            vmem_limit_bytes=vmem_limit,
        ),
    )(x2d, w1c, b1c, w2c, b2c)

    return out2d[:M].reshape(B, S, d_model)


def init_params(key, d_model, d_ffn, dtype=jnp.float32):
    """Deterministic init mimicking nn.Linear default (U(-1/sqrt(fan_in), +))."""
    k1, k2, k3, k4 = jax.random.split(key, 4)
    lim1 = 1.0 / math.sqrt(d_model)
    lim2 = 1.0 / math.sqrt(d_ffn)
    w1 = jax.random.uniform(k1, (d_model, d_ffn), dtype, -lim1, lim1)
    b1 = jax.random.uniform(k2, (d_ffn,), dtype, -lim1, lim1)
    w2 = jax.random.uniform(k3, (d_ffn, d_model), dtype, -lim2, lim2)
    b2 = jax.random.uniform(k4, (d_model,), dtype, -lim2, lim2)
    return w1, b1, w2, b2


if __name__ == "__main__":
    key = jax.random.PRNGKey(0)
    kx, kp = jax.random.split(key)

    batch, seq, d_model, d_ffn = 2, 8, 32, 64
    x = jax.random.normal(kx, (batch, seq, d_model), jnp.float32)
    w1, b1, w2, b2 = init_params(kp, d_model, d_ffn)

    out = positionwise_feed_forward(x, w1, b1, w2, b2)
    out = jax.block_until_ready(out)

    # Reference check (plain JAX, f32). bf16 matmul inputs -> loose tolerance.
    ref = jnp.maximum(x.reshape(-1, d_model) @ w1 + b1, 0.0) @ w2 + b2
    ref = ref.reshape(batch, seq, d_model)
    assert out.shape == (batch, seq, d_model)
    assert jnp.allclose(out, ref, atol=5e-2, rtol=5e-2), (
        float(jnp.max(jnp.abs(out - ref))))

    print("KERNEL_OK")
</pallas_src>

<mosaic_0001>
module attributes {stable_mosaic.version = 11 : i64} {
  func.func @_ffn_kernel(%arg0: i32, %arg1: i32, %arg2: memref<16x32xbf16, #tpu.memory_space<vmem>>, %arg3: memref<32x64xbf16, #tpu.memory_space<vmem>>, %arg4: memref<1x64xbf16, #tpu.memory_space<vmem>>, %arg5: memref<64x32xbf16, #tpu.memory_space<vmem>>, %arg6: memref<1x32xbf16, #tpu.memory_space<vmem>>, %arg7: memref<16x32xf32, #tpu.memory_space<vmem>>, %arg8: memref<16x32xf32, #tpu.memory_space<vmem>>) attributes {dimension_semantics = [#tpu.dimension_semantics<parallel>, #tpu.dimension_semantics<arbitrary>], iteration_bounds = array<i64: 1, 1>, scalar_prefetch = 0 : i64, scratch_operands = 1 : i64, tpu.core_type = #tpu.core_type<tc>, window_params = [{transform_indices = @transform_0, window_bounds = array<i64: 16, 32>}, {transform_indices = @transform_1, window_bounds = array<i64: 32, 64>}, {transform_indices = @transform_2, window_bounds = array<i64: 1, 64>}, {transform_indices = @transform_3, window_bounds = array<i64: 64, 32>}, {pipeline_mode = #tpu.pipeline_mode<synchronous>, transform_indices = @transform_4, window_bounds = array<i64: 1, 32>}, {transform_indices = @transform_5, window_bounds = array<i64: 16, 32>}]} {
    %c0_i32 = arith.constant 0 : i32
    %0 = arith.cmpi eq, %arg1, %c0_i32 : i32
    %1 = arith.extui %0 : i1 to i32
    %c0_i32_0 = arith.constant 0 : i32
    %2 = arith.cmpi ne, %1, %c0_i32_0 : i32
    scf.if %2 {
      %c0_16 = arith.constant 0 : index
      %c0_17 = arith.constant 0 : index
      %21 = vector.load %arg6[%c0_16, %c0_17] : memref<1x32xbf16, #tpu.memory_space<vmem>>, vector<1x32xbf16>
      %22 = arith.extf %21 : vector<1x32xbf16> to vector<1x32xf32>
      %23 = vector.shape_cast %22 : vector<1x32xf32> to vector<1x32xf32>
      %24 = vector.broadcast %23 : vector<1x32xf32> to vector<16x32xf32>
      %c0_18 = arith.constant 0 : index
      %c0_19 = arith.constant 0 : index
      %25 = vector.load %arg8[%c0_18, %c0_19] : memref<16x32xf32, #tpu.memory_space<vmem>>, vector<16x32xf32>
      tpu.vector_store %arg8[%c0_18, %c0_19], %24 {strides = array<i32>} : memref<16x32xf32, #tpu.memory_space<vmem>>, vector<16x32xf32>,
    } else {
    }
    %c0 = arith.constant 0 : index
    %c0_1 = arith.constant 0 : index
    %3 = vector.load %arg2[%c0, %c0_1] : memref<16x32xbf16, #tpu.memory_space<vmem>>, vector<16x32xbf16>
    %c0_2 = arith.constant 0 : index
    %c0_3 = arith.constant 0 : index
    %4 = vector.load %arg3[%c0_2, %c0_3] : memref<32x64xbf16, #tpu.memory_space<vmem>>, vector<32x64xbf16>
    %cst = arith.constant dense<0.000000e+00> : vector<16x64xf32>
    %5 = tpu.matmul %3, %4, %cst {dimension_numbers = #tpu.dot_dimension_numbers<[1], [0], [0], [1], [0, 0, 1, 1], [], []>} : vector<16x32xbf16>, vector<32x64xbf16>, vector<16x64xf32> -> vector<16x64xf32>
    %c0_4 = arith.constant 0 : index
    %c0_5 = arith.constant 0 : index
    %6 = vector.load %arg4[%c0_4, %c0_5] : memref<1x64xbf16, #tpu.memory_space<vmem>>, vector<1x64xbf16>
    %7 = arith.extf %6 : vector<1x64xbf16> to vector<1x64xf32>
    %8 = vector.broadcast %7 : vector<1x64xf32> to vector<16x64xf32>
    %9 = arith.addf %5, %8 : vector<16x64xf32>
    %cst_6 = arith.constant 0.000000e+00 : f32
    %10 = vector.broadcast %cst_6 : f32 to vector<16x64xf32>
    %11 = arith.maximumf %9, %10 : vector<16x64xf32>
    %c0_7 = arith.constant 0 : index
    %c0_8 = arith.constant 0 : index
    %12 = vector.load %arg8[%c0_7, %c0_8] : memref<16x32xf32, #tpu.memory_space<vmem>>, vector<16x32xf32>
    %13 = arith.truncf %11 : vector<16x64xf32> to vector<16x64xbf16>
    %c0_9 = arith.constant 0 : index
    %c0_10 = arith.constant 0 : index
    %14 = vector.load %arg5[%c0_9, %c0_10] : memref<64x32xbf16, #tpu.memory_space<vmem>>, vector<64x32xbf16>
    %cst_11 = arith.constant dense<0.000000e+00> : vector<16x32xf32>
    %15 = tpu.matmul %13, %14, %cst_11 {dimension_numbers = #tpu.dot_dimension_numbers<[1], [0], [0], [1], [0, 0, 1, 1], [], []>} : vector<16x64xbf16>, vector<64x32xbf16>, vector<16x32xf32> -> vector<16x32xf32>
    %16 = arith.addf %12, %15 : vector<16x32xf32>
    %c0_12 = arith.constant 0 : index
    %c0_13 = arith.constant 0 : index
    %17 = vector.load %arg8[%c0_12, %c0_13] : memref<16x32xf32, #tpu.memory_space<vmem>>, vector<16x32xf32>
    tpu.vector_store %arg8[%c0_12, %c0_13], %16 {strides = array<i32>} : memref<16x32xf32, #tpu.memory_space<vmem>>, vector<16x32xf32>,
    %c0_i32_14 = arith.constant 0 : i32
    %18 = arith.cmpi eq, %arg1, %c0_i32_14 : i32
    %19 = arith.extui %18 : i1 to i32
    %c0_i32_15 = arith.constant 0 : i32
    %20 = arith.cmpi ne, %19, %c0_i32_15 : i32
    scf.if %20 {
      %c0_16 = arith.constant 0 : index
      %c0_17 = arith.constant 0 : index
      %21 = vector.load %arg8[%c0_16, %c0_17] : memref<16x32xf32, #tpu.memory_space<vmem>>, vector<16x32xf32>
      %c0_18 = arith.constant 0 : index
      %c0_19 = arith.constant 0 : index
      %22 = vector.load %arg7[%c0_18, %c0_19] : memref<16x32xf32, #tpu.memory_space<vmem>>, vector<16x32xf32>
      tpu.vector_store %arg7[%c0_18, %c0_19], %21 {strides = array<i32>} : memref<16x32xf32, #tpu.memory_space<vmem>>, vector<16x32xf32>,
    } else {
    }
    return
  }
  func.func @transform_0(%arg0: i32, %arg1: i32) -> (i32, i32) {
    %c0_i32 = arith.constant 0 : i32
    %c0_i32_0 = arith.constant 0 : i32
    return %arg0, %c0_i32 : i32, i32
  }
  func.func @transform_1(%arg0: i32, %arg1: i32) -> (i32, i32) {
    %c0_i32 = arith.constant 0 : i32
    %c0_i32_0 = arith.constant 0 : i32
    return %c0_i32, %arg1 : i32, i32
  }
  func.func @transform_2(%arg0: i32, %arg1: i32) -> (i32, i32) {
    %c0_i32 = arith.constant 0 : i32
    %c0_i32_0 = arith.constant 0 : i32
    return %c0_i32, %arg1 : i32, i32
  }
  func.func @transform_3(%arg0: i32, %arg1: i32) -> (i32, i32) {
    %c0_i32 = arith.constant 0 : i32
    %c0_i32_0 = arith.constant 0 : i32
    return %arg1, %c0_i32 : i32, i32
  }
  func.func @transform_4(%arg0: i32, %arg1: i32) -> (i32, i32) {
    %c0_i32 = arith.constant 0 : i32
    %c0_i32_0 = arith.constant 0 : i32
    %c0_i32_1 = arith.constant 0 : i32
    return %c0_i32, %c0_i32_0 : i32, i32
  }
  func.func @transform_5(%arg0: i32, %arg1: i32) -> (i32, i32) {
    %c0_i32 = arith.constant 0 : i32
    %c0_i32_0 = arith.constant 0 : i32
    return %arg0, %c0_i32 : i32, i32
  }
}

</mosaic_0001>

<llo_original>
// kernel: tpu_custom_call.1
$region0: #{tpu_custom_call.1}
  #allocation0 [shape = 'u32[]', space=smem, size = 0x4, offset = 0x4, fixed_abs, tag = 'smem constant byte address 0x4 - core index']
  #allocation1 [shape = 'u32[144,128]{1,0:T(1,128)}', space=vmem, size = 0x12000, scoped, tag = 'internal scratch']
  #allocation2 [shape = 'f32[16,32]{1,0:T(8,128)}', space=vmem, size = 0x2000, scoped, tag = 'scratch operand']
  %s0 = inlined_call_operand.vmem [shape: bf16[16,32], index: 0, kind: input, shape index: {}]
  %s1 = inlined_call_operand.vmem [shape: bf16[32,64], index: 1, kind: input, shape index: {}]
  %s2 = inlined_call_operand.vmem [shape: bf16[1,64], index: 2, kind: input, shape index: {}]
  %s3 = inlined_call_operand.vmem [shape: bf16[64,32], index: 3, kind: input, shape index: {}]
  %s4 = inlined_call_operand.vmem [shape: bf16[1,32], index: 4, kind: input, shape index: {}]
  %s5 = inlined_call_operand.hbm [shape: f32[16,32], index: 5, kind: output, shape index: {}]
  %s6 = sld [smem:[#allocation0]]
  $region38: #{tpu_custom_call.1} parent=0
    _
  %s8 = ssub.s32 1, %s6
  %s9 = scalar_select 0, %s8, %s6
  $region1: #{tpu_custom_call.1} parent=0
    #allocation3 [shape = 'u8[8192]{0}', space=vmem, size = 0x2000, scoped, tag = 'output window, operand 0, single buffered']
    #allocation4 [shape = 's32[1]{0}', space=sflag, size = 0x4, scoped, tag = 'scoped memory for tpu_custom_call.1']
    %10 = vsyncpa [#allocation4], 0
    // Predicated region
    $region2: #{tpu_custom_call.1} parent=1 // pred_check
      _
    $region3: #{tpu_custom_call.1} parent=1 // pred_check_branch
      %12 = sbr.rel (0) target = $region5
    $region4: #{tpu_custom_call.1} parent=1 // pred_region
      _
    $region5: #{tpu_custom_call.1} parent=1 // pred_fallthru
      _
    // Predicated region
    $region6: #{tpu_custom_call.1} parent=1 // pred_check
      _
    $region7: #{tpu_custom_call.1} parent=1 // pred_check_branch
      %14 = sbr.rel (0) target = $region9
    $region8: #{tpu_custom_call.1} parent=1 // pred_region
      _
    $region9: #{tpu_custom_call.1} parent=1 // pred_fallthru
      _
    // Predicated region
    $region10: #{tpu_custom_call.1} parent=1 // pred_check
      _
    $region11: #{tpu_custom_call.1} parent=1 // pred_check_branch
      %16 = sbr.rel (0) target = $region13
    $region12: #{tpu_custom_call.1} parent=1 // pred_region
      _
    $region13: #{tpu_custom_call.1} parent=1 // pred_fallthru
      _
    // Predicated region
    $region14: #{tpu_custom_call.1} parent=1 // pred_check
      _
    $region15: #{tpu_custom_call.1} parent=1 // pred_check_branch
      %18 = sbr.rel (0) target = $region17
    $region16: #{tpu_custom_call.1} parent=1 // pred_region
      _
    $region17: #{tpu_custom_call.1} parent=1 // pred_fallthru
      _
    // Predicated region
    $region18: #{tpu_custom_call.1} parent=1 // pred_check
      _
    $region19: #{tpu_custom_call.1} parent=1 // pred_check_branch
      %20 = sbr.rel (0) target = $region21
    $region20: #{tpu_custom_call.1} parent=1 // pred_region
      _
    $region21: #{tpu_custom_call.1} parent=1 // pred_fallthru
      _
    %p22 = scmp.eq.s32.totalorder 0, 0
    // Predicated region
    $region22: #{tpu_custom_call.1} parent=1 // pred_check
      %p23 = pneg %p22
    $region23: #{tpu_custom_call.1} parent=1 // pred_check_branch
      %25 = sbr.rel (%p23) target = $region25
    $region24: #{tpu_custom_call.1} parent=1 // pred_region
      %v26 = vld [vmem:[%s4] sm:$0x1]
      %v27 = vunpack.c.l.bf16 %v26
      %v28 = vlaneseq
      %v29 = vshrl.u32 %v28, 7
      %v30 = vsub.s32 0, %v29
      %v31 = vrot.slane %v27, %v30
      %vm32 = vcmask 261120
      %33 = vst.msk [vmem:[#allocation2] sm:$0xff] %vm32, %v31
      %34 = vst.msk [vmem:[#allocation2 + $0x8] sm:$0xff] %vm32, %v31
    $region25: #{tpu_custom_call.1} parent=1 // pred_fallthru
      _
    %v35 = vld [vmem:[%s0] sm:$0xf]
    %v36 = vld [vmem:[%s0 + $0x4] sm:$0xf]
    %v37 = vld [vmem:[%s1] sm:$0xf]
    %v38 = vld [vmem:[%s1 + $0x4] sm:$0xf]
    %v39 = vld [vmem:[%s1 + $0x8] sm:$0xf]
    %v40 = vld [vmem:[%s1 + $0xc] sm:$0xf]
    %v41 = vld [vmem:[%s2] sm:$0x1]
    %v42 = vunpack.c.l.bf16 %v41
    %v43 = vlaneseq
    %v44 = vshrl.u32 %v43, 7
    %v45 = vsub.s32 0, %v44
    %v46 = vrot.slane %v42, %v45
    %v49 = vunpack.c.l.b16 %v35
    %v50 = vunpack.c.l.b16 %v36
    %v51 = vpack.c.b16 %v50, %v49
    %v56 = vunpack.c.l.b16 %v37
    %v57 = vunpack.c.l.b16 %v38
    %v58 = vunpack.c.l.b16 %v39
    %v59 = vunpack.c.l.b16 %v40
    %v60 = vpack.c.b16 %v57, %v56
    %v61 = vpack.c.b16 %v59, %v58
    %vm64 = vcmask 261120
    %v66 = vsel %vm64, %v51, 0
    %68 = vmatprep.subr.bf16.mxu0 0
    %69 = vmatpush1.bf16.msra.mxu0 %v60
    %70 = vmatprep.subr.bf16.mxu0 0
    %71 = vmatpush1.bf16.msra.mxu0 %v61
    %72 = vmatprep.subr.bf16.mxu0 0
    %73 = vmatpush1.bf16.msra.mxu0 0
    %74 = vmatprep.subr.bf16.mxu0 0
    %75 = vmatpush1.bf16.msra.mxu0 0
    %76 = vmatprep.subr.bf16.mxu0 0
    %77 = vmatpush1.bf16.msra.mxu0 0
    %78 = vmatprep.subr.bf16.mxu0 0
    %79 = vmatpush1.bf16.msra.mxu0 0
    %80 = vmatprep.subr.bf16.mxu0 0
    %81 = vmatpush1.bf16.msra.mxu0 0
    %82 = vmatprep.subr.bf16.mxu0 0
    %83 = vmatpush1.bf16.msra.mxu0 0
    %84 = vmatprep.subr.bf16.mxu0 0
    %85 = vmatpush1.bf16.msra.mxu0 0
    %86 = vmatprep.subr.bf16.mxu0 0
    %87 = vmatpush1.bf16.msra.mxu0 0
    %88 = vmatprep.subr.bf16.mxu0 0
    %89 = vmatpush1.bf16.msra.mxu0 0
    %90 = vmatprep.subr.bf16.mxu0 0
    %91 = vmatpush1.bf16.msra.mxu0 0
    %92 = vmatprep.subr.bf16.mxu0 0
    %93 = vmatpush1.bf16.msra.mxu0 0
    %94 = vmatprep.subr.bf16.mxu0 0
    %95 = vmatpush1.bf16.msra.mxu0 0
    %96 = vmatprep.subr.bf16.mxu0 0
    %97 = vmatpush1.bf16.msra.mxu0 0
    %98 = vmatprep.subr.bf16.mxu0 0
    %99 = vmatpush1.bf16.msra.mxu0 0
    %100 = vmatprep.mubr.bf16.mxu0 0
    %101 = vmatmul.mubr.bf16.gmra.mrb[0].mxu0 %v66
    %v102 = vpop.f32.mrb[0].mxu0
    %v103 = vadd.f32 %v46, %v102
    %v104 = vpop.f32.mrb[0].mxu0
    %v105 = vpop.f32.mrb[0].mxu0
    %v106 = vadd.f32 %v46, %v105
    %v107 = vpop.f32.mrb[0].mxu0
    %108 = vdwg.mxu0
    %v109 = vmax.f32 %v103, 0.0
    %v110 = vmax.f32 %v106, 0.0
    %v111 = vld [vmem:[#allocation2] sm:$0xff]
    %v112 = vld [vmem:[#allocation2 + $0x8] sm:$0xff]
    %v113 = vpack.c.bf16 %v110, %v109
    %v114 = vld [vmem:[%s3] sm:$0xf]
    %v115 = vld [vmem:[%s3 + $0x4] sm:$0xf]
    %v116 = vld [vmem:[%s3 + $0x8] sm:$0xf]
    %v117 = vld [vmem:[%s3 + $0xc] sm:$0xf]
    %v118 = vld [vmem:[%s3 + $0x10] sm:$0xf]
    %v119 = vld [vmem:[%s3 + $0x14] sm:$0xf]
    %v120 = vld [vmem:[%s3 + $0x18] sm:$0xf]
    %v121 = vld [vmem:[%s3 + $0x1c] sm:$0xf]
    %v130 = vunpack.c.l.b16 %v114
    %v131 = vunpack.c.l.b16 %v115
    %v132 = vunpack.c.l.b16 %v116
    %v133 = vunpack.c.l.b16 %v117
    %v134 = vunpack.c.l.b16 %v118
    %v135 = vunpack.c.l.b16 %v119
    %v136 = vunpack.c.l.b16 %v120
    %v137 = vunpack.c.l.b16 %v121
    %v138 = vpack.c.b16 %v131, %v130
    %v139 = vpack.c.b16 %v133, %v132
    %v140 = vpack.c.b16 %v135, %v134
    %v141 = vpack.c.b16 %v137, %v136
    %vm146 = vcmask 523264
    %v148 = vsel %vm146, %v113, 0
    %150 = vmatprep.subr.bf16.mxu0 0
    %151 = vmatpush1.bf16.msra.mxu0 %v138
    %152 = vmatprep.subr.bf16.mxu0 0
    %153 = vmatpush1.bf16.msra.mxu0 %v139
    %154 = vmatprep.subr.bf16.mxu0 0
    %155 = vmatpush1.bf16.msra.mxu0 %v140
    %156 = vmatprep.subr.bf16.mxu0 0
    %157 = vmatpush1.bf16.msra.mxu0 %v141
    %158 = vmatprep.subr.bf16.mxu0 0
    %159 = vmatpush1.bf16.msra.mxu0 0
    %160 = vmatprep.subr.bf16.mxu0 0
    %161 = vmatpush1.bf16.msra.mxu0 0
    %162 = vmatprep.subr.bf16.mxu0 0
    %163 = vmatpush1.bf16.msra.mxu0 0
    %164 = vmatprep.subr.bf16.mxu0 0
    %165 = vmatpush1.bf16.msra.mxu0 0
    %166 = vmatprep.subr.bf16.mxu0 0
    %167 = vmatpush1.bf16.msra.mxu0 0
    %168 = vmatprep.subr.bf16.mxu0 0
    %169 = vmatpush1.bf16.msra.mxu0 0
    %170 = vmatprep.subr.bf16.mxu0 0
    %171 = vmatpush1.bf16.msra.mxu0 0
    %172 = vmatprep.subr.bf16.mxu0 0
    %173 = vmatpush1.bf16.msra.mxu0 0
    %174 = vmatprep.subr.bf16.mxu0 0
    %175 = vmatpush1.bf16.msra.mxu0 0
    %176 = vmatprep.subr.bf16.mxu0 0
    %177 = vmatpush1.bf16.msra.mxu0 0
    %178 = vmatprep.subr.bf16.mxu0 0
    %179 = vmatpush1.bf16.msra.mxu0 0
    %180 = vmatprep.subr.bf16.mxu0 0
    %181 = vmatpush1.bf16.msra.mxu0 0
    %182 = vmatprep.mubr.bf16.mxu0 0
    %183 = vmatmul.mubr.bf16.gmra.mrb[0].mxu0 %v148
    %v184 = vpop.f32.mrb[0].mxu0
    %v185 = vadd.f32 0.0, %v184
    %v186 = vpop.f32.mrb[0].mxu0
    %v187 = vpop.f32.mrb[0].mxu0
    %v188 = vadd.f32 0.0, %v187
    %v189 = vpop.f32.mrb[0].mxu0
    %190 = vdwg.mxu0
    %v191 = vadd.f32 %v111, %v185
    %v192 = vadd.f32 %v112, %v188
    %193 = vst.msk [vmem:[#allocation2] sm:$0xff] %vm64, %v191
    %194 = vst.msk [vmem:[#allocation2 + $0x8] sm:$0xff] %vm64, %v192
    // Predicated region
    $region26: #{tpu_custom_call.1} parent=1 // pred_check
      %p195 = pneg %p22
    $region27: #{tpu_custom_call.1} parent=1 // pred_check_branch
      %197 = sbr.rel (%p195) target = $region29
    $region28: #{tpu_custom_call.1} parent=1 // pred_region
      %v198 = vld [vmem:[#allocation2] sm:$0xff]
      %v199 = vld [vmem:[#allocation2 + $0x8] sm:$0xff]
      %200 = vst.msk [vmem:[#allocation3] sm:$0xff] %vm64, %v198
      %201 = vst.msk [vmem:[#allocation3 + $0x8] sm:$0xff] %vm64, %v199
    $region29: #{tpu_custom_call.1} parent=1 // pred_fallthru
      _
    // Predicated region
    $region30: #{tpu_custom_call.1} parent=1 // pred_check
      _
    $region31: #{tpu_custom_call.1} parent=1 // pred_check_branch
      %203 = sbr.rel (0) target = $region33
    $region32: #{tpu_custom_call.1} parent=1 // pred_region
      %s205 = ssub.s32 256, 256
      %206 = vsyncadd [#allocation4], %s205
      %s207 = sshll.u32 [#allocation3], 4
      %s208 = int_to_ptr.vmem [resolvable:$true] %s207
      %213 = dma.vmem_to_hbm [thread:$0]  %s208, 256, %s5, [#allocation4], 128, 128, 8
    $region33: #{tpu_custom_call.1} parent=1 // pred_fallthru
      _
    // Predicated region
    $region34: #{tpu_custom_call.1} parent=1 // pred_check
      _
    $region35: #{tpu_custom_call.1} parent=1 // pred_check_branch
      %215 = sbr.rel (0) target = $region37
    $region36: #{tpu_custom_call.1} parent=1 // pred_region
      %216 = dma.done [#allocation4], 256
    $region37: #{tpu_custom_call.1} parent=1 // pred_fallthru
      _
    %217 = vsyncpa [#allocation4], 1

</llo_original>
